<compile_context>
chip_gen: v6e
topology: v6e:2x2x1
jax: 0.10.0
libtpu: 0.0.40
codegen_flags: <defaults>
</compile_context>

<pallas_src>
import functools

import jax
import jax.numpy as jnp
from jax import lax
from jax.experimental import pallas as pl
from jax.experimental.pallas import tpu as pltpu


# ---------------------------------------------------------------------------
# Hardware-aware sizing helpers
# ---------------------------------------------------------------------------
@functools.lru_cache(maxsize=None)
def _vmem_limit_bytes():
    """Generation-aware VMEM budget: ~3/4 of physical, capped at 100 MiB."""
    cap = None
    try:
        cap = getattr(pltpu.get_tpu_info(), "vmem_capacity_bytes", None)
    except Exception:
        cap = None
    if not cap:
        return 48 * 1024 * 1024            # safe fallback on v5e / v6e / v7x
    return int(min(cap * 3 // 4, 100 * 1024 * 1024))


def _pad_edges(e):
    return max(128, ((e + 127) // 128) * 128)


def _choose_edge_tile(n, e_pad):
    # S/D edge tiles: 2 inputs x 2 pipeline buffers x [N, TE] bf16 must fit a
    # fraction of the per-generation VMEM budget; prefer the largest tile.
    budget = _vmem_limit_bytes() // 4
    for te in (1024, 512, 256, 128):
        if e_pad % te == 0 and (2 * 2 * n * te * 2) <= budget:
            return te
    return 128


def _edge_grid(e_pad, te):
    # (parallel split for v7x megacore, arbitrary inner reduction axis)
    n_tiles = e_pad // te
    n_split = 2 if (n_tiles % 2 == 0 and n_tiles >= 2) else 1
    return n_split, n_tiles // n_split


def _row_tile(n):
    for tn in (512, 256, 128, 64, 32, 16, 8):
        if n % tn == 0:
            return tn
    return n


def _full_spec(shape):
    nd = len(shape)
    return pl.BlockSpec(shape, lambda *_: (0,) * nd)


def _f32(x):
    return x.astype(jnp.float32)


def _dot(a, b):
    return jnp.dot(_f32(a), _f32(b), preferred_element_type=jnp.float32)


def _gather(onehot, vals):
    # (onehot^T @ vals) without materializing the transpose: contract the node
    # (sublane) axis of the one-hot on the MXU.
    # TODO(synk): confirm in the MLIR dump that this lowers as a transposed-LHS
    #             MXU matmul (no per-tile XLU vxpose of the [N,TE] block).
    return lax.dot_general(_f32(onehot), _f32(vals), (((0,), (0,)), ((), ())),
                           preferred_element_type=jnp.float32)


# ---------------------------------------------------------------------------
# Fused MLP kernels
# ---------------------------------------------------------------------------
def _curv_fn_kernel(x_ref, w1_ref, b1_ref, w2_ref, b2_ref, kappa_ref, f_ref):
    # kappa MLP + all fn MLPs batched: relu(x@W1cat+b1) @ W2blockdiag + b2, sigmoid.
    h = jnp.maximum(_dot(x_ref[...], w1_ref[...]) + b1_ref[...], 0.0)
    kf = jax.nn.sigmoid(_dot(h, w2_ref[...]) + b2_ref[...])
    kappa_ref[...] = kf[:, 0:1]          # split in-kernel -> no wrapper relayout
    f_ref[...] = kf[:, 1:]


def curv_and_fn_mlps(x, w1cat, b1cat, w2bd, b2cat):
    n = x.shape[0]
    m = w2bd.shape[1]
    args = (x, w1cat, b1cat, w2bd, b2cat)
    return pl.pallas_call(
        _curv_fn_kernel,
        in_specs=[_full_spec(a.shape) for a in args],
        out_specs=[_full_spec((n, 1)), _full_spec((n, m - 1))],
        out_shape=[jax.ShapeDtypeStruct((n, 1), jnp.float32),
                   jax.ShapeDtypeStruct((n, m - 1), jnp.float32)],
    )(*args)


def _wmlp_kernel(w1_ref, b1_ref, w2_ref, b2_ref, w3_ref, b3_ref, o_ref):
    # The reference feeds a constant ones-row, so layer 1 collapses to a
    # column sum of W1 (drops an E-wide DMA and an M=1 matmul).
    h = jnp.maximum(jnp.sum(w1_ref[...], axis=0, keepdims=True) + b1_ref[...], 0.0)
    h = jnp.maximum(_dot(h, w2_ref[...]) + b2_ref[...], 0.0)
    o_ref[...] = jax.nn.sigmoid(_dot(h, w3_ref[...]) + b3_ref[...])


def weight_mlp(p):
    e = p["w3"].shape[1]
    args = (p["w1"], p["b1"], p["w2"], p["b2"], p["w3"], p["b3"])
    # TODO(synk): for very large E, tile the reduction axis of w1 and the output
    #             axis of w3 instead of whole-array VMEM specs.
    return pl.pallas_call(
        _wmlp_kernel,
        in_specs=[_full_spec(a.shape) for a in args],
        out_specs=_full_spec((1, e)),
        out_shape=jax.ShapeDtypeStruct((1, e), jnp.float32),   # lane-dense row
    )(*args)


# ---------------------------------------------------------------------------
# gamma / gamma2 (batched over fn MLPs, tiled over edges, split for megacore)
# ---------------------------------------------------------------------------
def _gamma1_kernel(f_ref, s_ref, d_ref, w_ref, o_ref):
    k = pl.program_id(1)

    @pl.when(k == 0)
    def _():
        o_ref[...] = jnp.zeros_like(o_ref)

    f = f_ref[...]                            # [N, C]  f32
    S = s_ref[...]                            # [N, TE] bf16 src one-hot
    D = d_ref[...]                            # [N, TE] bf16 dst one-hot
    w = w_ref[...]                            # [TE, 1] edge weights (edge-side fold)
    fd = _gather(D, f) - _gather(S, f)        # f[dst] - f[src]          [TE, C]
    wfd = w * fd
    # one wide scatter: [gamma | delta_f] = S @ [0.5*w*fd^2 | w*fd]
    rhs = jnp.concatenate([0.5 * wfd * fd, wfd], axis=1)      # [TE, 2C]
    o_ref[...] += _dot(S, rhs)


def _gamma2_kernel(fgd_ref, s_ref, d_ref, w_ref, o_ref, *, c):
    k = pl.program_id(1)

    @pl.when(k == 0)
    def _():
        o_ref[...] = jnp.zeros_like(o_ref)

    S = s_ref[...]
    D = d_ref[...]
    w = w_ref[...]
    # single wide gather of [f | gamma | delta_f] differences (2 matmuls, not 6)
    diff = _gather(D, fgd_ref[...]) - _gather(S, fgd_ref[...])    # [TE, 3C]
    fd = diff[:, :c]
    gd = diff[:, c:2 * c]
    dfd = diff[:, 2 * c:]
    # gamma2 = 0.5*delta_gamma - 0.5*scatter_src(w*fd*dfd) = S @ (0.5*w*(gd - fd*dfd))
    o_ref[...] += _dot(S, 0.5 * w * (gd - fd * dfd))


def compute_gammas(f_all, S, D, w_col):
    n, c = f_all.shape
    e_pad = S.shape[1]
    te = _choose_edge_tile(n, e_pad)
    n_split, n_inner = _edge_grid(e_pad, te)
    grid = (n_split, n_inner)

    def edge_idx(s, k):
        return (0, s * n_inner + k)

    s_spec = pl.BlockSpec((n, te), edge_idx)
    d_spec = pl.BlockSpec((n, te), edge_idx)
    w_spec = pl.BlockSpec((te, 1), lambda s, k: (s * n_inner + k, 0))
    cp = pltpu.CompilerParams(
        dimension_semantics=("parallel", "arbitrary"),
        vmem_limit_bytes=_vmem_limit_bytes())

    gd = pl.pallas_call(
        _gamma1_kernel,
        grid=grid,
        in_specs=[_full_spec((n, c)), s_spec, d_spec, w_spec],
        out_specs=pl.BlockSpec((None, n, 2 * c), lambda s, k: (s, 0, 0)),
        out_shape=jax.ShapeDtypeStruct((n_split, n, 2 * c), jnp.float32),
        compiler_params=cp,
    )(f_all, S, D, w_col)
    gd = jnp.sum(gd, axis=0)                   # combine per-core partial slabs
    gamma = gd[:, :c]

    fgd = jnp.concatenate([f_all, gd], axis=1)  # [N, 3C] = [f | gamma | delta_f]
    gamma2 = pl.pallas_call(
        functools.partial(_gamma2_kernel, c=c),
        grid=grid,
        in_specs=[_full_spec((n, 3 * c)), s_spec, d_spec, w_spec],
        out_specs=pl.BlockSpec((None, n, c), lambda s, k: (s, 0, 0)),
        out_shape=jax.ShapeDtypeStruct((n_split, n, c), jnp.float32),
        compiler_params=cp,
    )(fgd, S, D, w_col)
    gamma2 = jnp.sum(gamma2, axis=0)
    return gamma, gamma2


# ---------------------------------------------------------------------------
# Curvature loss (reference broadcast kappa[N,1] * gamma[N] -> [N,N]), row-parallel
# ---------------------------------------------------------------------------
def _loss_kernel(kappa_ref, gt_ref, g2t_ref, o_ref):
    c = gt_ref.shape[0]
    kap = kappa_ref[...]                                    # [TN, 1]
    # Loop-free over all fn MLPs, lane-dense [C, N] gamma layout.
    diff = kap[:, :, None] * gt_ref[...][None] - g2t_ref[...][None]   # [TN, C, N]
    rel = jnp.sum(jnp.maximum(diff, 0.0), axis=2)           # [TN, C]
    o_ref[...] = jnp.sum(rel, axis=1, keepdims=True) - float(c) * kap


def curvature_loss(kappa, gamma, gamma2):
    n = kappa.shape[0]
    c = gamma.shape[1]
    tn = _row_tile(n)
    gt = gamma.T        # tiny [C, N] relayout (C == fn_count, a few rows)
    g2t = gamma2.T
    per_row = pl.pallas_call(
        _loss_kernel,
        grid=(n // tn,),
        in_specs=[pl.BlockSpec((tn, 1), lambda i: (i, 0)),
                  _full_spec((c, n)), _full_spec((c, n))],
        out_specs=pl.BlockSpec((tn, 1), lambda i: (i, 0)),
        out_shape=jax.ShapeDtypeStruct((n, 1), jnp.float32),
        compiler_params=pltpu.CompilerParams(
            dimension_semantics=("parallel",),
            vmem_limit_bytes=_vmem_limit_bytes()),
    )(kappa, gt, g2t)
    return jnp.sum(per_row)


# ---------------------------------------------------------------------------
# GATConv layer (1 head), tiled over edges, shifted softmax across tiles
# ---------------------------------------------------------------------------
def _gat_kernel(x_ref, w_ref, as_ref, ad_ref, b_ref, s_ref, d_ref, m_ref,
                o_ref, xla_s, ash_s, nd_s,
                *, negative_slope, apply_relu, final_mean):
    k = pl.program_id(0)
    f_out = w_ref.shape[1]

    @pl.when(k == 0)
    def _():
        xl = _dot(x_ref[...], w_ref[...])                    # x @ W          [N, Fout]
        asrc = _dot(xl, as_ref[...])                         # <xl, att_src>  [N, 1]
        adst = _dot(xl, ad_ref[...])                         # <xl, att_dst>  [N, 1]
        # Per-dst softmax shift: leaky(max(asrc)+adst) upper-bounds every incoming
        # logit (incl. the self loop) -> exp(.)<=1, shifted softmax identical to PyG.
        shift = jnp.max(asrc) + adst
        shift = jnp.where(shift >= 0, shift, negative_slope * shift)
        xla_s[...] = jnp.concatenate([xl, asrc], axis=1)     # [N, Fout+1]
        ash_s[...] = jnp.concatenate([adst, shift], axis=1)  # [N, 2]
        nd_s[...] = jnp.zeros_like(nd_s)

    S = s_ref[...]                                           # [N, TE] bf16 src one-hot
    D = d_ref[...]                                           # [N, TE] bf16 dst one-hot
    m = m_ref[...]                                           # [TE, 1] edge keep mask
    xa = _gather(S, xla_s[...])                              # [x_src | asrc_src] [TE,Fout+1]
    dsh = _gather(D, ash_s[...])                             # [adst_dst | shift_dst] [TE,2]
    logit = xa[:, f_out:f_out + 1] + dsh[:, 0:1]
    logit = jnp.where(logit >= 0, logit, negative_slope * logit)    # LeakyReLU
    p = m * jnp.exp(logit - dsh[:, 1:2])                     # masked, shifted    [TE, 1]
    # merged num|den scatter to dst in one wide matmul -> [N, Fout+1]
    nd_s[...] += _dot(D, jnp.concatenate([p * xa[:, :f_out], p], axis=1))

    @pl.when(k == pl.num_programs(0) - 1)
    def _():
        xla = xla_s[...]
        ash = ash_s[...]
        nd = nd_s[...]
        xl = xla[:, :f_out]
        # Self loop (GATConv remove_self_loops + add_self_loops) added analytically.
        a_self = xla[:, f_out:f_out + 1] + ash[:, 0:1]
        a_self = jnp.where(a_self >= 0, a_self, negative_slope * a_self)
        p_self = jnp.exp(a_self - ash[:, 1:2])               # <= 1 by construction
        num = nd[:, :f_out] + p_self * xl
        den = nd[:, f_out:f_out + 1] + p_self
        out = num / den + b_ref[...]
        if apply_relu:
            out = jnp.maximum(out, 0.0)
        if final_mean:
            out = jnp.mean(jax.nn.sigmoid(out), axis=1, keepdims=True)
        o_ref[...] = out


def gat_conv(x, S, D, mask_col, layer, *, apply_relu, final_mean):
    n, f_in = x.shape
    f_out = layer["w"].shape[1]
    e_pad = S.shape[1]
    te = _choose_edge_tile(n, e_pad)
    out_cols = 1 if final_mean else f_out
    # TODO(synk): megacore split of the edge axis (per-core num/den slabs) as done
    #             for the gamma kernels; kept single-core here for simplicity.
    return pl.pallas_call(
        functools.partial(_gat_kernel, negative_slope=0.2,
                          apply_relu=apply_relu, final_mean=final_mean),
        grid=(e_pad // te,),
        in_specs=[_full_spec((n, f_in)), _full_spec((f_in, f_out)),
                  _full_spec((f_out, 1)), _full_spec((f_out, 1)),
                  _full_spec((1, f_out)),
                  pl.BlockSpec((n, te), lambda k: (0, k)),
                  pl.BlockSpec((n, te), lambda k: (0, k)),
                  pl.BlockSpec((te, 1), lambda k: (k, 0))],
        out_specs=_full_spec((n, out_cols)),
        out_shape=jax.ShapeDtypeStruct((n, out_cols), jnp.float32),
        scratch_shapes=[pltpu.VMEM((n, f_out + 1), jnp.float32),
                        pltpu.VMEM((n, 2), jnp.float32),
                        pltpu.VMEM((n, f_out + 1), jnp.float32)],
        compiler_params=pltpu.CompilerParams(
            dimension_semantics=("arbitrary",),
            vmem_limit_bytes=_vmem_limit_bytes()),
    )(x, layer["w"], layer["att_src"], layer["att_dst"], layer["b"],
      S, D, mask_col)


# ---------------------------------------------------------------------------
# Parameter init (deterministic; PyTorch-Linear-style uniform)
# ---------------------------------------------------------------------------
def _uniform(key, shape, bound):
    return jax.random.uniform(key, shape, jnp.float32, -bound, bound)


def init_params(key, in_channels, hidden_channels, out_channels, num_layers,
                num_edges, fn_count=3, curv_hidden=20, weight_hidden=64):
    keys = iter(jax.random.split(key, 128))

    def lin(fan_in, fan_out):
        b = 1.0 / (fan_in ** 0.5)
        return (_uniform(next(keys), (fan_in, fan_out), b),
                _uniform(next(keys), (1, fan_out), b))

    # kappa MLP + fn MLPs batched: W1 concatenated, W2 block-diagonal.
    m = 1 + fn_count
    w1s, b1s, w2s, b2s = [], [], [], []
    for _ in range(m):
        w1, b1 = lin(in_channels, curv_hidden)
        w2, b2 = lin(curv_hidden, 1)
        w1s.append(w1), b1s.append(b1), w2s.append(w2), b2s.append(b2)
    w1cat = jnp.concatenate(w1s, axis=1)
    b1cat = jnp.concatenate(b1s, axis=1)
    w2bd = jnp.zeros((m * curv_hidden, m), jnp.float32)
    for i in range(m):
        w2bd = w2bd.at[i * curv_hidden:(i + 1) * curv_hidden, i].set(w2s[i][:, 0])
    b2cat = jnp.concatenate(b2s, axis=1)
    params = {"curv_fn": dict(w1=w1cat, b1=b1cat, w2=w2bd, b2=b2cat)}

    w1, b1 = lin(num_edges, weight_hidden)
    w2, b2 = lin(weight_hidden, weight_hidden)
    w3, b3 = lin(weight_hidden, num_edges)
    params["wmlp"] = dict(w1=w1, b1=b1, w2=w2, b2=b2, w3=w3, b3=b3)

    params["gat"] = []
    for i in range(num_layers):
        din = in_channels if i == 0 else hidden_channels
        dout = out_channels if i == num_layers - 1 else hidden_channels
        w, b = lin(din, dout)
        att_bound = 1.0 / (dout ** 0.5)
        params["gat"].append(dict(
            w=w, b=b,
            att_src=_uniform(next(keys), (dout, 1), att_bound),
            att_dst=_uniform(next(keys), (dout, 1), att_bound)))
    return params


# ---------------------------------------------------------------------------
# Forward pass
# ---------------------------------------------------------------------------
def dc_gat_forward(params, x, edge_index, p=5, num_layers=2):
    N = x.shape[0]
    E = edge_index.shape[1]
    src = edge_index[0]
    dst = edge_index[1]

    # Pad the edge axis to a multiple of 128; padded edges have all-zero one-hot
    # columns, zero weight and zero mask, so they contribute nothing anywhere.
    e_pad = _pad_edges(E)
    pad = e_pad - E
    src_p = jnp.pad(src, (0, pad), constant_values=-1)
    dst_p = jnp.pad(dst, (0, pad), constant_values=-1)
    node_ids = jnp.arange(N)
    # bf16 incidence one-hots (0/1 exact in bf16): halves the N x E DMA traffic.
    S = (node_ids[:, None] == src_p[None, :]).astype(jnp.bfloat16)   # [N, E_pad] src
    D = (node_ids[:, None] == dst_p[None, :]).astype(jnp.bfloat16)   # [N, E_pad] dst

    # kappa [N,1] and all fn_count f's [N,C] from one fused block-diagonal MLP.
    cf = params["curv_fn"]
    kappa, f_all = curv_and_fn_mlps(x, cf["w1"], cf["b1"], cf["w2"], cf["b2"])

    # Edge weights as an [E_pad, 1] column (folded into the edge-side operand).
    w_row = weight_mlp(params["wmlp"])                        # [1, E]
    w_col = jnp.pad(w_row[0], (0, pad)).reshape(e_pad, 1)

    # Batched gamma / gamma2 for all fn MLPs, then row-parallel curvature loss.
    gamma, gamma2 = compute_gammas(f_all, S, D, w_col)
    curv_loss = curvature_loss(kappa, gamma, gamma2)

    # GAT layers with cumulative top-k curvature vertex removal (edge masking).
    kappa_flat = kappa[:, 0]
    # GATConv removes pre-existing self loops and adds exactly one per node
    # (handled analytically in the kernel), so raw self edges are dropped here.
    non_self = src != dst
    keep = jnp.ones((E,), bool)

    def apply_removal(keep, k_pct):
        num_to_remove = int(N * k_pct / 100)
        if num_to_remove == 0:
            return keep
        _, top_idx = jax.lax.top_k(kappa_flat, num_to_remove)
        vmask = jnp.ones((N,), jnp.float32).at[top_idx].set(0.0)
        return keep & (vmask[src] != 0.0) & (vmask[dst] != 0.0)

    def mask_col(keep):
        m = (keep & non_self).astype(jnp.float32)
        return jnp.pad(m, (0, pad)).reshape(e_pad, 1)

    h = x
    for i in range(num_layers - 1):
        keep = apply_removal(keep, p * i)
        h = gat_conv(h, S, D, mask_col(keep), params["gat"][i],
                     apply_relu=True, final_mean=False)
        # TODO(synk): F.dropout(p=dropout, training=self.training) -> eval-mode no-op here.
    keep = apply_removal(keep, p * (num_layers - 1))
    out = gat_conv(h, S, D, mask_col(keep), params["gat"][-1],
                   apply_relu=False, final_mean=True)          # fused sigmoid + mean
    return out, curv_loss


# ---------------------------------------------------------------------------
if __name__ == "__main__":
    N, E = 64, 2048
    in_channels, hidden_channels, out_channels = 16, 32, 8
    num_layers = 2
    fn_count = 3
    dropout = 0.5  # inactive (eval semantics)

    key = jax.random.PRNGKey(0)
    kx, ke, kp = jax.random.split(key, 3)
    x = jax.random.normal(kx, (N, in_channels), jnp.float32)
    edge_index = jax.random.randint(ke, (2, E), 0, N, dtype=jnp.int32)

    params = init_params(kp, in_channels, hidden_channels, out_channels,
                         num_layers, E, fn_count=fn_count)

    out, curv_loss = dc_gat_forward(params, x, edge_index, p=10,
                                    num_layers=num_layers)
    jax.block_until_ready((out, curv_loss))
    assert out.shape == (N, 1)
    assert curv_loss.shape == ()
    assert bool(jnp.all(jnp.isfinite(out)))
    assert bool(jnp.isfinite(curv_loss))
    print("KERNEL_OK")
</pallas_src>

<mosaic_0001>
module attributes {stable_mosaic.version = 11 : i64} {
  func.func @_curv_fn_kernel(%arg0: memref<64x16xf32, #tpu.memory_space<vmem>>, %arg1: memref<16x80xf32, #tpu.memory_space<vmem>>, %arg2: memref<1x80xf32, #tpu.memory_space<vmem>>, %arg3: memref<80x4xf32, #tpu.memory_space<vmem>>, %arg4: memref<1x4xf32, #tpu.memory_space<vmem>>, %arg5: memref<64x1xf32, #tpu.memory_space<vmem>>, %arg6: memref<64x3xf32, #tpu.memory_space<vmem>>) attributes {dimension_semantics = [], scalar_prefetch = 0 : i64, scratch_operands = 0 : i64, tpu.core_type = #tpu.core_type<tc>} {
    %c0 = arith.constant 0 : index
    %c0_0 = arith.constant 0 : index
    %0 = vector.load %arg0[%c0, %c0_0] : memref<64x16xf32, #tpu.memory_space<vmem>>, vector<64x16xf32>
    %c0_1 = arith.constant 0 : index
    %c0_2 = arith.constant 0 : index
    %1 = vector.load %arg1[%c0_1, %c0_2] : memref<16x80xf32, #tpu.memory_space<vmem>>, vector<16x80xf32>
    %cst = arith.constant dense<0.000000e+00> : vector<64x80xf32>
    %2 = tpu.matmul %0, %1, %cst {dimension_numbers = #tpu.dot_dimension_numbers<[1], [0], [0], [1], [0, 0, 1, 1], [], []>} : vector<64x16xf32>, vector<16x80xf32>, vector<64x80xf32> -> vector<64x80xf32>
    %c0_3 = arith.constant 0 : index
    %c0_4 = arith.constant 0 : index
    %3 = vector.load %arg2[%c0_3, %c0_4] : memref<1x80xf32, #tpu.memory_space<vmem>>, vector<1x80xf32>
    %4 = vector.broadcast %3 : vector<1x80xf32> to vector<64x80xf32>
    %5 = arith.addf %2, %4 : vector<64x80xf32>
    %cst_5 = arith.constant 0.000000e+00 : f32
    %6 = vector.broadcast %cst_5 : f32 to vector<64x80xf32>
    %7 = arith.maximumf %5, %6 : vector<64x80xf32>
    %c0_6 = arith.constant 0 : index
    %c0_7 = arith.constant 0 : index
    %8 = vector.load %arg3[%c0_6, %c0_7] : memref<80x4xf32, #tpu.memory_space<vmem>>, vector<80x4xf32>
    %cst_8 = arith.constant dense<0.000000e+00> : vector<64x4xf32>
    %9 = tpu.matmul %7, %8, %cst_8 {dimension_numbers = #tpu.dot_dimension_numbers<[1], [0], [0], [1], [0, 0, 1, 1], [], []>} : vector<64x80xf32>, vector<80x4xf32>, vector<64x4xf32> -> vector<64x4xf32>
    %c0_9 = arith.constant 0 : index
    %c0_10 = arith.constant 0 : index
    %10 = vector.load %arg4[%c0_9, %c0_10] : memref<1x4xf32, #tpu.memory_space<vmem>>, vector<1x4xf32>
    %11 = vector.broadcast %10 : vector<1x4xf32> to vector<64x4xf32>
    %12 = arith.addf %9, %11 : vector<64x4xf32>
    %13 = arith.negf %12 : vector<64x4xf32>
    %14 = math.exp %13 : vector<64x4xf32>
    %cst_11 = arith.constant 1.000000e+00 : f32
    %15 = vector.broadcast %cst_11 : f32 to vector<64x4xf32>
    %16 = arith.addf %15, %14 : vector<64x4xf32>
    %17 = arith.divf %15, %16 : vector<64x4xf32>
    %18 = vector.extract_strided_slice %17 {offsets = [0, 0], sizes = [64, 1], strides = [1, 1]} : vector<64x4xf32> to vector<64x1xf32>
    %c0_12 = arith.constant 0 : index
    %c0_13 = arith.constant 0 : index
    %19 = vector.load %arg5[%c0_12, %c0_13] : memref<64x1xf32, #tpu.memory_space<vmem>>, vector<64x1xf32>
    tpu.vector_store %arg5[%c0_12, %c0_13], %18 {strides = array<i32>} : memref<64x1xf32, #tpu.memory_space<vmem>>, vector<64x1xf32>,
    %20 = vector.extract_strided_slice %17 {offsets = [0, 1], sizes = [64, 3], strides = [1, 1]} : vector<64x4xf32> to vector<64x3xf32>
    %c0_14 = arith.constant 0 : index
    %c0_15 = arith.constant 0 : index
    %21 = vector.load %arg6[%c0_14, %c0_15] : memref<64x3xf32, #tpu.memory_space<vmem>>, vector<64x3xf32>
    tpu.vector_store %arg6[%c0_14, %c0_15], %20 {strides = array<i32>} : memref<64x3xf32, #tpu.memory_space<vmem>>, vector<64x3xf32>,
    return
  }
}

</mosaic_0001>

<llo_original>
// kernel: tpu_custom_call.1
$region0: #{tpu_custom_call.1}
  #allocation0 [shape = 'u32[]', space=smem, size = 0x4, offset = 0x4, fixed_abs, tag = 'smem constant byte address 0x4 - core index']
  #allocation1 [shape = 'u32[144,128]{1,0:T(1,128)}', space=vmem, size = 0x12000, scoped, tag = 'internal scratch']
  %s0 = inlined_call_operand.vmem [shape: f32[64,16], index: 0, kind: input, shape index: {}]
  %s1 = inlined_call_operand.vmem [shape: f32[16,80], index: 1, kind: input, shape index: {}]
  %s2 = inlined_call_operand.vmem [shape: f32[1,80], index: 2, kind: input, shape index: {}]
  %s3 = inlined_call_operand.vmem [shape: f32[80,4], index: 3, kind: input, shape index: {}]
  %s4 = inlined_call_operand.vmem [shape: f32[1,4], index: 4, kind: input, shape index: {}]
  %s5 = inlined_call_operand.vmem [shape: f32[64,1], index: 5, kind: output, shape index: {0}]
  %s6 = inlined_call_operand.vmem [shape: f32[64,3], index: 6, kind: output, shape index: {1}]
  %7 = xla_tuple %s5, %s6
  %s8 = sld [smem:[#allocation0]]
  $region38: #{tpu_custom_call.1} parent=0
    _
  %s10 = ssub.s32 1, %s8
  %s11 = scalar_select 0, %s10, %s8
  // Predicated region
  $region2: #{tpu_custom_call.1} parent=0 // pred_check
    _
  $region3: #{tpu_custom_call.1} parent=0 // pred_check_branch
    %13 = sbr.rel (0) target = $region5
  $region4: #{tpu_custom_call.1} parent=0 // pred_region
    _
  $region5: #{tpu_custom_call.1} parent=0 // pred_fallthru
    _
  // Predicated region
  $region6: #{tpu_custom_call.1} parent=0 // pred_check
    _
  $region7: #{tpu_custom_call.1} parent=0 // pred_check_branch
    %15 = sbr.rel (0) target = $region9
  $region8: #{tpu_custom_call.1} parent=0 // pred_region
    _
  $region9: #{tpu_custom_call.1} parent=0 // pred_fallthru
    _
  // Predicated region
  $region10: #{tpu_custom_call.1} parent=0 // pred_check
    _
  $region11: #{tpu_custom_call.1} parent=0 // pred_check_branch
    %17 = sbr.rel (0) target = $region13
  $region12: #{tpu_custom_call.1} parent=0 // pred_region
    _
  $region13: #{tpu_custom_call.1} parent=0 // pred_fallthru
    _
  // Predicated region
  $region14: #{tpu_custom_call.1} parent=0 // pred_check
    _
  $region15: #{tpu_custom_call.1} parent=0 // pred_check_branch
    %19 = sbr.rel (0) target = $region17
  $region16: #{tpu_custom_call.1} parent=0 // pred_region
    _
  $region17: #{tpu_custom_call.1} parent=0 // pred_fallthru
    _
  // Predicated region
  $region18: #{tpu_custom_call.1} parent=0 // pred_check
    _
  $region19: #{tpu_custom_call.1} parent=0 // pred_check_branch
    %21 = sbr.rel (0) target = $region21
  $region20: #{tpu_custom_call.1} parent=0 // pred_region
    _
  $region21: #{tpu_custom_call.1} parent=0 // pred_fallthru
    _
  %v22 = vld [vmem:[%s0] sm:$0xff]
  %v23 = vld [vmem:[%s0 + $0x8] sm:$0xff]
  %v24 = vld [vmem:[%s0 + $0x10] sm:$0xff]
  %v25 = vld [vmem:[%s0 + $0x18] sm:$0xff]
  %v26 = vld [vmem:[%s0 + $0x20] sm:$0xff]
  %v27 = vld [vmem:[%s0 + $0x28] sm:$0xff]
  %v28 = vld [vmem:[%s0 + $0x30] sm:$0xff]
  %v29 = vld [vmem:[%s0 + $0x38] sm:$0xff]
  %v30 = vld [vmem:[%s1] sm:$0xff]
  %v31 = vld [vmem:[%s1 + $0x8] sm:$0xff]
  %v32 = vld [vmem:[%s2] sm:$0x1]
  %v34 = vlaneseq
  %v35 = vshrl.u32 %v34, 7
  %v36 = vsub.s32 0, %v35
  %v37 = vrot.slane %v32, %v36
  %vm39 = vcmask 130048
  %v41 = vsel %vm39, %v22, 0
  %v44 = vsel %vm39, %v23, 0
  %v47 = vsel %vm39, %v24, 0
  %v50 = vsel %vm39, %v25, 0
  %v53 = vsel %vm39, %v26, 0
  %v56 = vsel %vm39, %v27, 0
  %v59 = vsel %vm39, %v28, 0
  %v62 = vsel %vm39, %v29, 0
  %64 = vmatprep.subr.mxu0 0.0
  %65 = vmatpush1.msra.mxu0 0.0
  %66 = vmatprep.subr.mxu0 0.0
  %67 = vmatpush1.msra.mxu0 0.0
  %68 = vmatprep.subr.mxu0 0.0
  %69 = vmatpush1.msra.mxu0 0.0
  %70 = vmatprep.subr.mxu0 0.0
  %71 = vmatpush1.msra.mxu0 0.0
  %72 = vmatprep.subr.mxu0 0.0
  %73 = vmatpush1.msra.mxu0 0.0
  %74 = vmatprep.subr.mxu0 0.0
  %75 = vmatpush1.msra.mxu0 0.0
  %76 = vmatprep.subr.mxu0 0.0
  %77 = vmatpush1.msra.mxu0 0.0
  %78 = vmatprep.subr.mxu0 0.0
  %79 = vmatpush1.msra.mxu0 0.0
  %80 = vmatprep.subr.mxu0 0.0
  %81 = vmatpush1.msra.mxu0 0.0
  %82 = vmatprep.subr.mxu0 0.0
  %83 = vmatpush1.msra.mxu0 0.0
  %84 = vmatprep.subr.mxu0 0.0
  %85 = vmatpush1.msra.mxu0 0.0
  %86 = vmatprep.subr.mxu0 0.0
  %87 = vmatpush1.msra.mxu0 0.0
  %88 = vmatprep.subr.mxu0 0.0
  %89 = vmatpush1.msra.mxu0 0.0
  %90 = vmatprep.subr.mxu0 0.0
  %91 = vmatpush1.msra.mxu0 0.0
  %92 = vmatprep.subr.mxu0 0.0
  %93 = vmatpush1.msra.mxu0 %v31
  %94 = vmatprep.subr.mxu0 0.0
  %95 = vmatpush1.msra.mxu0 %v30
  %96 = vmatprep.subr.mxu0 0.0
  %97 = vmatpush2.msra.mxu0 0.0
  %98 = vmatprep.subr.mxu0 0.0
  %99 = vmatpush2.msra.mxu0 0.0
  %100 = vmatprep.subr.mxu0 0.0
  %101 = vmatpush2.msra.mxu0 0.0
  %102 = vmatprep.subr.mxu0 0.0
  %103 = vmatpush2.msra.mxu0 0.0
  %104 = vmatprep.subr.mxu0 0.0
  %105 = vmatpush2.msra.mxu0 0.0
  %106 = vmatprep.subr.mxu0 0.0
  %107 = vmatpush2.msra.mxu0 0.0
  %108 = vmatprep.subr.mxu0 0.0
  %109 = vmatpush2.msra.mxu0 0.0
  %110 = vmatprep.subr.mxu0 0.0
  %111 = vmatpush2.msra.mxu0 0.0
  %112 = vmatprep.subr.mxu0 0.0
  %113 = vmatpush2.msra.mxu0 0.0
  %114 = vmatprep.subr.mxu0 0.0
  %115 = vmatpush2.msra.mxu0 0.0
  %116 = vmatprep.subr.mxu0 0.0
  %117 = vmatpush2.msra.mxu0 0.0
  %118 = vmatprep.subr.mxu0 0.0
  %119 = vmatpush2.msra.mxu0 0.0
  %120 = vmatprep.subr.mxu0 0.0
  %121 = vmatpush2.msra.mxu0 0.0
  %122 = vmatprep.subr.mxu0 0.0
  %123 = vmatpush2.msra.mxu0 0.0
  %124 = vmatprep.subr.mxu0 0.0
  %125 = vmatpush2.msra.mxu0 0.0
  %126 = vmatprep.subr.mxu0 0.0
  %127 = vmatpush2.msra.mxu0 0.0
  %128 = vmatprep.mubr.f32.mxu0 0.0
  %129 = vmatmul.mubr.f32.gmra.mxu0 %v41
  %v130 = vpop.f32.mrf.mxu0
  %v131 = vadd.f32 %v37, %v130
  %v132 = vpop.f32.mrf.mxu0
  %133 = vmatprep.mubr.f32.mxu0 0.0
  %134 = vmatmul.mubr.f32.gmra.mxu0 %v44
  %v135 = vpop.f32.mrf.mxu0
  %v136 = vadd.f32 %v37, %v135
  %v137 = vpop.f32.mrf.mxu0
  %138 = vmatprep.mubr.f32.mxu0 0.0
  %139 = vmatmul.mubr.f32.gmra.mxu0 %v47
  %v140 = vpop.f32.mrf.mxu0
  %v141 = vadd.f32 %v37, %v140
  %v142 = vpop.f32.mrf.mxu0
  %143 = vmatprep.mubr.f32.mxu0 0.0
  %144 = vmatmul.mubr.f32.gmra.mxu0 %v50
  %v145 = vpop.f32.mrf.mxu0
  %v146 = vadd.f32 %v37, %v145
  %v147 = vpop.f32.mrf.mxu0
  %148 = vmatprep.mubr.f32.mxu0 0.0
  %149 = vmatmul.mubr.f32.gmra.mxu0 %v53
  %v150 = vpop.f32.mrf.mxu0
  %v151 = vadd.f32 %v37, %v150
  %v152 = vpop.f32.mrf.mxu0
  %153 = vmatprep.mubr.f32.mxu0 0.0
  %154 = vmatmul.mubr.f32.gmra.mxu0 %v56
  %v155 = vpop.f32.mrf.mxu0
  %v156 = vadd.f32 %v37, %v155
  %v157 = vpop.f32.mrf.mxu0
  %158 = vmatprep.mubr.f32.mxu0 0.0
  %159 = vmatmul.mubr.f32.gmra.mxu0 %v59
  %v160 = vpop.f32.mrf.mxu0
  %v161 = vadd.f32 %v37, %v160
  %v162 = vpop.f32.mrf.mxu0
  %163 = vmatprep.mubr.f32.mxu0 0.0
  %164 = vmatmul.mubr.f32.gmra.mxu0 %v62
  %v165 = vpop.f32.mrf.mxu0
  %v166 = vadd.f32 %v37, %v165
  %v167 = vpop.f32.mrf.mxu0
  %168 = vdwg.mxu0
  %v169 = vmax.f32 %v131, 0.0
  %v170 = vmax.f32 %v136, 0.0
  %v171 = vmax.f32 %v141, 0.0
  %v172 = vmax.f32 %v146, 0.0
  %v173 = vmax.f32 %v151, 0.0
  %v174 = vmax.f32 %v156, 0.0
  %v175 = vmax.f32 %v161, 0.0
  %v176 = vmax.f32 %v166, 0.0
  %v177 = vld [vmem:[%s3] sm:$0xff]
  %v178 = vld [vmem:[%s3 + $0x8] sm:$0xff]
  %v179 = vld [vmem:[%s3 + $0x10] sm:$0xff]
  %v180 = vld [vmem:[%s3 + $0x18] sm:$0xff]
  %v181 = vld [vmem:[%s3 + $0x20] sm:$0xff]
  %v182 = vld [vmem:[%s3 + $0x28] sm:$0xff]
  %v183 = vld [vmem:[%s3 + $0x30] sm:$0xff]
  %v184 = vld [vmem:[%s3 + $0x38] sm:$0xff]
  %v185 = vld [vmem:[%s3 + $0x40] sm:$0xff]
  %v186 = vld [vmem:[%s3 + $0x48] sm:$0xff]
  %v187 = vld [vmem:[%s4] sm:$0x1]
  %v189 = vlaneseq
  %v190 = vshrl.u32 %v189, 7
  %v191 = vsub.s32 0, %v190
  %v192 = vrot.slane %v187, %v191
  %vm194 = vcmask 654336
  %v196 = vsel %vm194, %v169, 0
  %v199 = vsel %vm194, %v170, 0
  %v202 = vsel %vm194, %v171, 0
  %v205 = vsel %vm194, %v172, 0
  %v208 = vsel %vm194, %v173, 0
  %v211 = vsel %vm194, %v174, 0
  %v214 = vsel %vm194, %v175, 0
  %v217 = vsel %vm194, %v176, 0
  %219 = vmatprep.subr.mxu0 0.0
  %220 = vmatpush1.msra.mxu0 0.0
  %221 = vmatprep.subr.mxu0 0.0
  %222 = vmatpush1.msra.mxu0 0.0
  %223 = vmatprep.subr.mxu0 0.0
  %224 = vmatpush1.msra.mxu0 0.0
  %225 = vmatprep.subr.mxu0 0.0
  %226 = vmatpush1.msra.mxu0 0.0
  %227 = vmatprep.subr.mxu0 0.0
  %228 = vmatpush1.msra.mxu0 0.0
  %229 = vmatprep.subr.mxu0 0.0
  %230 = vmatpush1.msra.mxu0 0.0
  %231 = vmatprep.subr.mxu0 0.0
  %232 = vmatpush1.msra.mxu0 %v186
  %233 = vmatprep.subr.mxu0 0.0
  %234 = vmatpush1.msra.mxu0 %v185
  %235 = vmatprep.subr.mxu0 0.0
  %236 = vmatpush1.msra.mxu0 %v184
  %237 = vmatprep.subr.mxu0 0.0
  %238 = vmatpush1.msra.mxu0 %v183
  %239 = vmatprep.subr.mxu0 0.0
  %240 = vmatpush1.msra.mxu0 %v182
  %241 = vmatprep.subr.mxu0 0.0
  %242 = vmatpush1.msra.mxu0 %v181
  %243 = vmatprep.subr.mxu0 0.0
  %244 = vmatpush1.msra.mxu0 %v180
  %245 = vmatprep.subr.mxu0 0.0
  %246 = vmatpush1.msra.mxu0 %v179
  %247 = vmatprep.subr.mxu0 0.0
  %248 = vmatpush1.msra.mxu0 %v178
  %249 = vmatprep.subr.mxu0 0.0
  %250 = vmatpush1.msra.mxu0 %v177
  %251 = vmatprep.subr.mxu0 0.0
  %252 = vmatpush2.msra.mxu0 0.0
  %253 = vmatprep.subr.mxu0 0.0
  %254 = vmatpush2.msra.mxu0 0.0
  %255 = vmatprep.subr.mxu0 0.0
  %256 = vmatpush2.msra.mxu0 0.0
  %257 = vmatprep.subr.mxu0 0.0
  %258 = vmatpush2.msra.mxu0 0.0
  %259 = vmatprep.subr.mxu0 0.0
  %260 = vmatpush2.msra.mxu0 0.0
  %261 = vmatprep.subr.mxu0 0.0
  %262 = vmatpush2.msra.mxu0 0.0
  %263 = vmatprep.subr.mxu0 0.0
  %264 = vmatpush2.msra.mxu0 0.0
  %265 = vmatprep.subr.mxu0 0.0
  %266 = vmatpush2.msra.mxu0 0.0
  %267 = vmatprep.subr.mxu0 0.0
  %268 = vmatpush2.msra.mxu0 0.0
  %269 = vmatprep.subr.mxu0 0.0
  %270 = vmatpush2.msra.mxu0 0.0
  %271 = vmatprep.subr.mxu0 0.0
  %272 = vmatpush2.msra.mxu0 0.0
  %273 = vmatprep.subr.mxu0 0.0
  %274 = vmatpush2.msra.mxu0 0.0
  %275 = vmatprep.subr.mxu0 0.0
  %276 = vmatpush2.msra.mxu0 0.0
  %277 = vmatprep.subr.mxu0 0.0
  %278 = vmatpush2.msra.mxu0 0.0
  %279 = vmatprep.subr.mxu0 0.0
  %280 = vmatpush2.msra.mxu0 0.0
  %281 = vmatprep.subr.mxu0 0.0
  %282 = vmatpush2.msra.mxu0 0.0
  %283 = vmatprep.mubr.f32.mxu0 0.0
  %284 = vmatmul.mubr.f32.gmra.mxu0 %v196
  %v285 = vpop.f32.mrf.mxu0
  %v286 = vadd.f32 %v192, %v285
  %v287 = vpop.f32.mrf.mxu0
  %288 = vmatprep.mubr.f32.mxu0 0.0
  %289 = vmatmul.mubr.f32.gmra.mxu0 %v199
  %v290 = vpop.f32.mrf.mxu0
  %v291 = vadd.f32 %v192, %v290
  %v292 = vpop.f32.mrf.mxu0
  %293 = vmatprep.mubr.f32.mxu0 0.0
  %294 = vmatmul.mubr.f32.gmra.mxu0 %v202
  %v295 = vpop.f32.mrf.mxu0
  %v296 = vadd.f32 %v192, %v295
  %v297 = vpop.f32.mrf.mxu0
  %298 = vmatprep.mubr.f32.mxu0 0.0
  %299 = vmatmul.mubr.f32.gmra.mxu0 %v205
  %v300 = vpop.f32.mrf.mxu0
  %v301 = vadd.f32 %v192, %v300
  %v302 = vpop.f32.mrf.mxu0
  %303 = vmatprep.mubr.f32.mxu0 0.0
  %304 = vmatmul.mubr.f32.gmra.mxu0 %v208
  %v305 = vpop.f32.mrf.mxu0
  %v306 = vadd.f32 %v192, %v305
  %v307 = vpop.f32.mrf.mxu0
  %308 = vmatprep.mubr.f32.mxu0 0.0
  %309 = vmatmul.mubr.f32.gmra.mxu0 %v211
  %v310 = vpop.f32.mrf.mxu0
  %v311 = vadd.f32 %v192, %v310
  %v312 = vpop.f32.mrf.mxu0
  %313 = vmatprep.mubr.f32.mxu0 0.0
  %314 = vmatmul.mubr.f32.gmra.mxu0 %v214
  %v315 = vpop.f32.mrf.mxu0
  %v316 = vadd.f32 %v192, %v315
  %v317 = vpop.f32.mrf.mxu0
  %318 = vmatprep.mubr.f32.mxu0 0.0
  %319 = vmatmul.mubr.f32.gmra.mxu0 %v217
  %v320 = vpop.f32.mrf.mxu0
  %v321 = vadd.f32 %v192, %v320
  %v322 = vpop.f32.mrf.mxu0
  %323 = vdwg.mxu0
  %v324 = vxor.u32 %v286, 2147483648
  %v325 = vxor.u32 %v291, 2147483648
  %v326 = vxor.u32 %v296, 2147483648
  %v327 = vxor.u32 %v301, 2147483648
  %v328 = vxor.u32 %v306, 2147483648
  %v329 = vxor.u32 %v311, 2147483648
  %v330 = vxor.u32 %v316, 2147483648
  %v331 = vxor.u32 %v321, 2147483648
  %v332 = vmul.f32 %v324, 1.442695
  %v333 = vpow.pop %v332
  %v334 = vmul.f32 %v325, 1.442695
  %v335 = vpow.pop %v334
  %v336 = vmul.f32 %v326, 1.442695
  %v337 = vpow.pop %v336
  %v338 = vmul.f32 %v327, 1.442695
  %v339 = vpow.pop %v338
  %v340 = vmul.f32 %v328, 1.442695
  %v341 = vpow.pop %v340
  %v342 = vmul.f32 %v329, 1.442695
  %v343 = vpow.pop %v342
  %v344 = vmul.f32 %v330, 1.442695
  %v345 = vpow.pop %v344
  %v346 = vmul.f32 %v331, 1.442695
  %v347 = vpow.pop %v346
  %v348 = vadd.f32 %v333, 1.0
  %v349 = vadd.f32 %v335, 1.0
  %v350 = vadd.f32 %v337, 1.0
  %v351 = vadd.f32 %v339, 1.0
  %v352 = vadd.f32 %v341, 1.0
  %v353 = vadd.f32 %v343, 1.0
  %v354 = vadd.f32 %v345, 1.0
  %v355 = vadd.f32 %v347, 1.0
  %v356 = vrcp.pop %v348
  %v357 = vmul.f32 1.0, %v356
  %v358 = vrcp.pop %v349
  %v359 = vmul.f32 1.0, %v358
  %v360 = vrcp.pop %v350
  %v361 = vmul.f32 1.0, %v360
  %v362 = vrcp.pop %v351
  %v363 = vmul.f32 1.0, %v362
  %v364 = vrcp.pop %v352
  %v365 = vmul.f32 1.0, %v364
  %v366 = vrcp.pop %v353
  %v367 = vmul.f32 1.0, %v366
  %v368 = vrcp.pop %v354
  %v369 = vmul.f32 1.0, %v368
  %v370 = vrcp.pop %v355
  %v371 = vmul.f32 1.0, %v370
  %vm372 = vcmask 7168
  %373 = vst.msk [vmem:[%s5] sm:$0xff] %vm372, %v357
  %374 = vst.msk [vmem:[%s5 + $0x8] sm:$0xff] %vm372, %v359
  %375 = vst.msk [vmem:[%s5 + $0x10] sm:$0xff] %vm372, %v361
  %376 = vst.msk [vmem:[%s5 + $0x18] sm:$0xff] %vm372, %v363
  %377 = vst.msk [vmem:[%s5 + $0x20] sm:$0xff] %vm372, %v365
  %378 = vst.msk [vmem:[%s5 + $0x28] sm:$0xff] %vm372, %v367
  %379 = vst.msk [vmem:[%s5 + $0x30] sm:$0xff] %vm372, %v369
  %380 = vst.msk [vmem:[%s5 + $0x38] sm:$0xff] %vm372, %v371
  %389 = vrot.lane.b32.xlu0 %v357, 127
  %v390 = vpop.permute.xlu0 %389
  %391 = vrot.lane.b32.xlu0 %v359, 127
  %v392 = vpop.permute.xlu0 %391
  %393 = vrot.lane.b32.xlu0 %v361, 127
  %v394 = vpop.permute.xlu0 %393
  %395 = vrot.lane.b32.xlu0 %v363, 127
  %v396 = vpop.permute.xlu0 %395
  %397 = vrot.lane.b32.xlu0 %v365, 127
  %v398 = vpop.permute.xlu0 %397
  %399 = vrot.lane.b32.xlu0 %v367, 127
  %v400 = vpop.permute.xlu0 %399
  %401 = vrot.lane.b32.xlu0 %v369, 127
  %v402 = vpop.permute.xlu0 %401
  %403 = vrot.lane.b32.xlu0 %v371, 127
  %v404 = vpop.permute.xlu0 %403
  %vm413 = vcmask 23552
  %414 = vst.msk [vmem:[%s6] sm:$0xff] %vm413, %v390
  %415 = vst.msk [vmem:[%s6 + $0x8] sm:$0xff] %vm413, %v392
  %416 = vst.msk [vmem:[%s6 + $0x10] sm:$0xff] %vm413, %v394
  %417 = vst.msk [vmem:[%s6 + $0x18] sm:$0xff] %vm413, %v396
  %418 = vst.msk [vmem:[%s6 + $0x20] sm:$0xff] %vm413, %v398
  %419 = vst.msk [vmem:[%s6 + $0x28] sm:$0xff] %vm413, %v400
  %420 = vst.msk [vmem:[%s6 + $0x30] sm:$0xff] %vm413, %v402
  %421 = vst.msk [vmem:[%s6 + $0x38] sm:$0xff] %vm413, %v404
  // Predicated region
  $region22: #{tpu_custom_call.1} parent=0 // pred_check
    _
  $region23: #{tpu_custom_call.1} parent=0 // pred_check_branch
    %423 = sbr.rel (0) target = $region25
  $region24: #{tpu_custom_call.1} parent=0 // pred_region
    _
  $region25: #{tpu_custom_call.1} parent=0 // pred_fallthru
    _
  // Predicated region
  $region26: #{tpu_custom_call.1} parent=0 // pred_check
    _
  $region27: #{tpu_custom_call.1} parent=0 // pred_check_branch
    %425 = sbr.rel (0) target = $region29
  $region28: #{tpu_custom_call.1} parent=0 // pred_region
    _
  $region29: #{tpu_custom_call.1} parent=0 // pred_fallthru
    _
  // Predicated region
  $region30: #{tpu_custom_call.1} parent=0 // pred_check
    _
  $region31: #{tpu_custom_call.1} parent=0 // pred_check_branch
    %427 = sbr.rel (0) target = $region33
  $region32: #{tpu_custom_call.1} parent=0 // pred_region
    _
  $region33: #{tpu_custom_call.1} parent=0 // pred_fallthru
    _
  // Predicated region
  $region34: #{tpu_custom_call.1} parent=0 // pred_check
    _
  $region35: #{tpu_custom_call.1} parent=0 // pred_check_branch
    %429 = sbr.rel (0) target = $region37
  $region36: #{tpu_custom_call.1} parent=0 // pred_region
    _
  $region37: #{tpu_custom_call.1} parent=0 // pred_fallthru
    _

</llo_original>
